<compile_context>
chip_gen: v5e
topology: v5e:2x2
jax: 0.10.0
libtpu: 0.0.40
codegen_flags: <defaults>
</compile_context>

<pallas_src>
import functools

import jax
import jax.numpy as jnp
from jax.experimental import pallas as pl
from jax.experimental.pallas import tpu as pltpu


def _suppixunpool_kernel_single(spx_ref, pooled_ref, out_ref):
    """One grid step = one (batch, pixel-tile); single MXU pass over K_pad."""
    labels = spx_ref[0]                         # (1, TN) int32 labels
    pooled = pooled_ref[0]                      # (C, K_pad)
    k_pad = pooled.shape[-1]

    # onehot[k, p] = 1.0 iff labels[p] == k.  (K_pad, 1) iota broadcast against
    # the (1, TN) label row -> no full-size int32 iota intermediate.
    k_iota = jax.lax.broadcasted_iota(jnp.int32, (k_pad, 1), 0)
    onehot = (k_iota == labels).astype(pooled.dtype)            # (K_pad, TN)

    # out[c, p] = sum_k pooled[c, k] * onehot[k, p] = pooled[c, labels[p]]
    out = jnp.dot(pooled, onehot, preferred_element_type=jnp.float32)
    out_ref[0] = out.astype(out_ref.dtype)


def _suppixunpool_kernel_slab(spx_ref, pooled_ref, out_ref, acc_ref, *,
                              k_slab, num_slabs, compute_dtype):
    """Large-K path: loop the contraction over K slabs so only a
    (k_slab, TN) one-hot is ever live in VMEM."""
    labels = spx_ref[0]                         # (1, TN) int32 labels
    acc_ref[...] = jnp.zeros_like(acc_ref)      # (C, TN) f32 accumulator

    @pl.loop(0, num_slabs)
    def _(s):
        off = pl.multiple_of(s * k_slab, k_slab)
        k_iota = jax.lax.broadcasted_iota(jnp.int32, (k_slab, 1), 0) + off
        onehot = (k_iota == labels).astype(compute_dtype)       # (k_slab, TN)
        acc_ref[...] += jnp.dot(
            pooled_ref[0, :, pl.ds(off, k_slab)], onehot,
            preferred_element_type=jnp.float32)

    out_ref[0] = acc_ref[...].astype(out_ref.dtype)


def sup_pix_unpool(pooled, spx, *, target_out_bytes=2 << 20, k_slab=512,
                   onehot_cap_bytes=8 << 20):
    """Superpixel unpooling (gather).

    pooled: (B, C, K) float array of per-superpixel features
    spx:    (B, H, W) integer superpixel labels in [0, K)
    returns: (B, C, H, W) with out[b, c, h, w] = pooled[b, c, spx[b, h, w]]
    """
    B, C, K = pooled.shape
    Bs, H, W = spx.shape
    assert Bs == B, "pooled and spx batch dims must match"
    spx = spx.astype(jnp.int32)
    N = H * W
    itemsize = jnp.dtype(pooled.dtype).itemsize

    # --- K padding: lane-dense (multiple of 128); multiple of k_slab when the
    #     slab loop is used so every slab is full. -----------------------------
    K_pad = max(128, pl.cdiv(K, 128) * 128)
    if K_pad > k_slab:
        K_pad = pl.cdiv(K_pad, k_slab) * k_slab
        num_slabs = K_pad // k_slab
        k_win = k_slab
    else:
        num_slabs = 1
        k_win = K_pad

    # --- Pixel-tile size: ~target_out_bytes of output per grid step, capped so
    #     the (k_win, TN) one-hot stays under onehot_cap_bytes of VMEM. --------
    n_ceil = pl.cdiv(N, 128) * 128
    tn_out = target_out_bytes // max(1, C * itemsize)
    tn_oh = onehot_cap_bytes // max(1, k_win * itemsize)
    TN = min(n_ceil, tn_out, tn_oh, 32768)
    TN = max(128, (TN // 128) * 128)
    n_tiles = pl.cdiv(N, TN)
    N_pad = n_tiles * TN

    # --- Host-side padding.  Only the cheap int32 labels are padded to N_pad;
    #     the output is written at its natural (B, C, N) shape (no post-slice).
    pooled_pad = pooled
    if K_pad != K:
        pooled_pad = jnp.pad(pooled, ((0, 0), (0, 0), (0, K_pad - K)))
    spx_flat = spx.reshape(B, 1, N)
    if N_pad != N:
        # Padded pixels get label 0; they fall in the ragged tail of the final
        # output block, which Pallas discards on writeback.
        spx_flat = jnp.pad(spx_flat, ((0, 0), (0, 0), (0, N_pad - N)))

    # --- Kernel / scratch selection. -----------------------------------------
    if num_slabs == 1:
        kernel = _suppixunpool_kernel_single
        scratch = []
    else:
        kernel = functools.partial(
            _suppixunpool_kernel_slab,
            k_slab=k_slab, num_slabs=num_slabs, compute_dtype=pooled.dtype)
        scratch = [pltpu.VMEM((C, TN), jnp.float32)]

    # --- VMEM budget: 2x double-buffered blocks + one-hot slab + accumulator.
    pooled_blk_bytes = C * K_pad * itemsize
    blk_bytes = 2 * (TN * 4 + pooled_blk_bytes + C * TN * itemsize)
    inter_bytes = 2 * k_win * TN * itemsize + (C * TN * 4 if num_slabs > 1 else 0)
    vmem_limit = int(min(max(int(1.5 * (blk_bytes + inter_bytes)) + (4 << 20),
                             32 << 20), 64 << 20))

    # The pooled block's index_map is constant in the pixel-tile axis, so it is
    # re-fetched only when b changes; for very large (C, K_pad) blocks a single
    # buffer is enough and frees VMEM for a bigger TN (v7x has 64 MiB).
    pooled_spec_kwargs = {}
    if pooled_blk_bytes > (8 << 20):
        pooled_spec_kwargs = dict(pipeline_mode=pl.Buffered(1))

    out = pl.pallas_call(
        kernel,
        out_shape=jax.ShapeDtypeStruct((B, C, N), pooled.dtype),
        grid_spec=pltpu.PrefetchScalarGridSpec(
            num_scalar_prefetch=0,
            grid=(B, n_tiles),
            in_specs=[
                # labels: one pixel tile per step
                pl.BlockSpec((1, 1, TN), lambda b, n: (b, 0, n)),
                # pooled features: VMEM-resident across the pixel-tile axis
                pl.BlockSpec((1, C, K_pad), lambda b, n: (b, 0, 0),
                             **pooled_spec_kwargs),
            ],
            out_specs=pl.BlockSpec((1, C, TN), lambda b, n: (b, 0, n)),
            scratch_shapes=scratch,
        ),
        compiler_params=pltpu.CompilerParams(
            dimension_semantics=("parallel", "parallel"),
            vmem_limit_bytes=vmem_limit,
        ),
    )(spx_flat, pooled_pad)

    return out.reshape(B, C, H, W)


def _reference(pooled, spx):
    """Pure-JAX reference: out[b, c, h, w] = pooled[b, c, spx[b, h, w]]."""
    B, C, K = pooled.shape
    _, H, W = spx.shape
    idx = spx.reshape(B, -1).astype(jnp.int32)                 # (B, N)
    out = jax.vmap(lambda p, s: p[:, s])(pooled, idx)          # (B, C, N)
    return out.reshape(B, C, H, W)


if __name__ == "__main__":
    key = jax.random.PRNGKey(0)
    k0, k1, k2 = jax.random.split(key, 3)
    B, C, H, W = 2, 4, 16, 16

    # --- Test 1: small K -> single-pass MXU gather path. ----------------------
    K = 16
    pooled = jax.random.normal(k0, (B, C, K), dtype=jnp.float32)
    # Deterministic superpixel map: 4x4 blocks -> K = 16 labels.
    hh = jnp.arange(H)[:, None] // 4
    ww = jnp.arange(W)[None, :] // 4
    spx = jnp.broadcast_to((hh * 4 + ww).astype(jnp.int32), (B, H, W))

    out = jax.block_until_ready(sup_pix_unpool(pooled, spx))
    ref = _reference(pooled, spx)
    assert out.shape == (B, C, H, W)
    assert jnp.allclose(out, ref), "single-pass path does not match reference"

    # --- Test 2: large K -> K-slab accumulation path. -------------------------
    K2 = 600
    pooled2 = jax.random.normal(k1, (B, C, K2), dtype=jnp.float32)
    spx2 = jax.random.randint(k2, (B, H, W), 0, K2, dtype=jnp.int32)

    out2 = jax.block_until_ready(sup_pix_unpool(pooled2, spx2))
    ref2 = _reference(pooled2, spx2)
    assert out2.shape == (B, C, H, W)
    assert jnp.allclose(out2, ref2), "K-slab path does not match reference"

    print("KERNEL_OK")
</pallas_src>

<mosaic_0001>
module attributes {stable_mosaic.version = 11 : i64} {
  func.func @_suppixunpool_kernel_single(%arg0: i32, %arg1: i32, %arg2: memref<1x1x256xi32, #tpu.memory_space<vmem>>, %arg3: memref<1x4x128xf32, #tpu.memory_space<vmem>>, %arg4: memref<1x4x256xf32, #tpu.memory_space<vmem>>) attributes {dimension_semantics = [#tpu.dimension_semantics<parallel>, #tpu.dimension_semantics<parallel>], iteration_bounds = array<i64: 2, 1>, scalar_prefetch = 0 : i64, scratch_operands = 0 : i64, tpu.core_type = #tpu.core_type<tc>, window_params = [{transform_indices = @transform_0, window_bounds = array<i64: 1, 1, 256>}, {transform_indices = @transform_1, window_bounds = array<i64: 1, 4, 128>}, {transform_indices = @transform_2, window_bounds = array<i64: 1, 4, 256>}]} {
    %c0 = arith.constant 0 : index
    %c0_0 = arith.constant 0 : index
    %c0_1 = arith.constant 0 : index
    %0 = vector.load %arg2[%c0, %c0_0, %c0_1] : memref<1x1x256xi32, #tpu.memory_space<vmem>>, vector<1x1x256xi32>
    %1 = vector.shape_cast %0 : vector<1x1x256xi32> to vector<1x256xi32>
    %c0_2 = arith.constant 0 : index
    %c0_3 = arith.constant 0 : index
    %c0_4 = arith.constant 0 : index
    %2 = vector.load %arg3[%c0_2, %c0_3, %c0_4] : memref<1x4x128xf32, #tpu.memory_space<vmem>>, vector<1x4x128xf32>
    %3 = vector.shape_cast %2 : vector<1x4x128xf32> to vector<4x128xf32>
    %4 = tpu.iota {dimensions = array<i32: 0>} : vector<128x1xi32>
    %5 = vector.broadcast %4 : vector<128x1xi32> to vector<128x256xi32>
    %6 = vector.broadcast %1 : vector<1x256xi32> to vector<128x256xi32>
    %7 = arith.cmpi eq, %5, %6 : vector<128x256xi32>
    %8 = arith.extui %7 : vector<128x256xi1> to vector<128x256xi32>
    %9 = arith.sitofp %8 : vector<128x256xi32> to vector<128x256xf32>
    %cst = arith.constant dense<0.000000e+00> : vector<4x256xf32>
    %10 = tpu.matmul %3, %9, %cst {dimension_numbers = #tpu.dot_dimension_numbers<[1], [0], [0], [1], [0, 0, 1, 1], [], []>} : vector<4x128xf32>, vector<128x256xf32>, vector<4x256xf32> -> vector<4x256xf32>
    %c0_5 = arith.constant 0 : index
    %c0_6 = arith.constant 0 : index
    %c0_7 = arith.constant 0 : index
    %11 = vector.load %arg4[%c0_5, %c0_6, %c0_7] : memref<1x4x256xf32, #tpu.memory_space<vmem>>, vector<1x4x256xf32>
    %12 = vector.shape_cast %11 : vector<1x4x256xf32> to vector<4x256xf32>
    %13 = vector.shape_cast %10 : vector<4x256xf32> to vector<1x4x256xf32>
    tpu.vector_store %arg4[%c0_5, %c0_6, %c0_7], %13 {strides = array<i32>} : memref<1x4x256xf32, #tpu.memory_space<vmem>>, vector<1x4x256xf32>,
    return
  }
  func.func @transform_0(%arg0: i32, %arg1: i32) -> (i32, i32, i32) {
    %c0_i32 = arith.constant 0 : i32
    %c0_i32_0 = arith.constant 0 : i32
    return %arg0, %c0_i32, %arg1 : i32, i32, i32
  }
  func.func @transform_1(%arg0: i32, %arg1: i32) -> (i32, i32, i32) {
    %c0_i32 = arith.constant 0 : i32
    %c0_i32_0 = arith.constant 0 : i32
    %c0_i32_1 = arith.constant 0 : i32
    return %arg0, %c0_i32, %c0_i32_0 : i32, i32, i32
  }
  func.func @transform_2(%arg0: i32, %arg1: i32) -> (i32, i32, i32) {
    %c0_i32 = arith.constant 0 : i32
    %c0_i32_0 = arith.constant 0 : i32
    return %arg0, %c0_i32, %arg1 : i32, i32, i32
  }
}

</mosaic_0001>

<llo_original>
// kernel: tpu_custom_call.1
$region0: #{tpu_custom_call.1}
  #allocation0 [shape = 'u32[]', space=smem, size = 0x4, offset = 0x4, fixed_abs, tag = 'smem constant byte address 0x4 - core index']
  #allocation1 [shape = 'u32[72,128]{1,0:T(1,128)}', space=vmem, size = 0x9000, scoped, tag = 'internal scratch']
  %s0 = inlined_call_operand.hbm [shape: s32[2,1,256], index: 0, kind: input, shape index: {}]
  %s1 = inlined_call_operand.hbm [shape: f32[2,4,128], index: 1, kind: input, shape index: {}]
  %s2 = inlined_call_operand.hbm [shape: f32[2,4,256], index: 2, kind: output, shape index: {}]
  %s3 = sld [smem:[#allocation0]]
  $region49: #{tpu_custom_call.1} parent=0
    _
  %s5 = ssub.s32 1, %s3
  %s6 = scalar_select 0, %s5, %s3
  $region1: #{tpu_custom_call.1} parent=0
    #allocation2 [shape = 'u8[2048]{0}', space=vmem, size = 0x800, scoped, tag = 'input window, operand 0']
    #allocation3 [shape = 's32[2]{0}', space=sflag, size = 0x8, scoped, tag = 'scoped memory for tpu_custom_call.1']
    #allocation4 [shape = 's32[2]{0}', space=sflag, size = 0x8, scoped, tag = 'scoped memory for tpu_custom_call.1']
    #allocation5 [shape = 'u8[4096]{0}', space=vmem, size = 0x1000, scoped, tag = 'input window, operand 1']
    #allocation6 [shape = 's32[2]{0}', space=sflag, size = 0x8, scoped, tag = 'scoped memory for tpu_custom_call.1']
    #allocation7 [shape = 'u8[8192]{0}', space=vmem, size = 0x2000, scoped, tag = 'output window, operand 0']
    %7 = vsyncpa [#allocation3], 0
    %s8 = scalar_lea.sflag [#allocation3], 1
    %9 = vsyncpa %s8, 0
    %10 = vsyncpa [#allocation6], 0
    %s11 = scalar_lea.sflag [#allocation6], 1
    %12 = vsyncpa %s11, 0
    %13 = vsyncpa [#allocation4], 0
    %s14 = scalar_lea.sflag [#allocation4], 1
    %15 = vsyncpa %s14, 0
    loop: start=0, step=1, limit=4
    $region2: #{tpu_custom_call.1} parent=1 // loop_pre_header
      _
    $region3: #{tpu_custom_call.1} parent=1 // loop_header
      %s17 = sphi 0, %s21
      %p18 = scmp.ge.s32.totalorder %s17, 4
      %s24 = sphi 0, %s36
      %s25 = sphi 0, %s32
      %s26 = sphi 0, %s24
      %s27 = sphi 0, %s25
      %s28 = sphi 0, %s26
      %s29 = sphi 0, %s27
      %s41 = sphi 0, %s43
      %s44 = sphi 0, %s41
      %s45 = sphi 0, %s44
      %s61 = sphi 0, %s45
      %s67 = sphi 0, %s69
      %s70 = sphi 0, %s67
      %s71 = sphi 0, %s70
      %s87 = sphi 0, %s71
      %s95 = sphi 0, %s97
      %s98 = sphi 0, %s95
      %s99 = sphi 0, %s98
      %s115 = sphi 0, %s99
    $region4: #{tpu_custom_call.1} parent=1 // loop_header_branch
      %20 = sbr.rel (%p18) target = $region8
    $region5: #{tpu_custom_call.1} parent=1 // loop_body
      %s22 = ssub.s32 %s17, 1
      %s23 = ssub.s32 %s17, 2
      %s30 = sadd.s32 1, %s25
      %p31 = scmp.ge.s32.totalorder %s30, 1
      %s32 = scalar_select %p31, 0, %s30
      %s33 = sadd.s32 1, %s24
      %s34 = scalar_select %p31, %s33, %s24
      %p35 = scmp.ge.s32.totalorder %s34, 2
      %s36 = scalar_select %p35, 0, %s34
      %s37 = ssub.s32 %s24, %s36
      %s38 = ssub.s32 %s25, %s32
      %s39 = sor.u32 %s37, %s38
      %p40 = scmp.eq.s32.totalorder %s39, 0
      %s42 = sadd.s32 %s41, 1
      %s43 = scalar_select %p40, %s41, %s42
      %p46 = pneg %p40
      %p47 = scmp.eq.s32.totalorder %s17, 1
      %p48 = por %p46, %p47
      %p49 = scmp.ne.s32.totalorder %s41, %s44
      %p50 = scmp.eq.s32.totalorder %s17, 0
      %p51 = por %p49, %p50
      %p52 = scmp.ne.s32.totalorder %s41, %s44
      %p53 = scmp.eq.s32.totalorder %s22, 1
      %p54 = por %p52, %p53
      %p55 = scmp.ne.s32.totalorder %s44, %s45
      %p56 = scmp.eq.s32.totalorder %s22, 0
      %p57 = por %p55, %p56
      %p58 = scmp.ne.s32.totalorder %s44, %s45
      %p59 = scmp.eq.s32.totalorder %s23, 1
      %p60 = por %p58, %p59
      %p62 = scmp.ne.s32.totalorder %s45, %s61
      %p63 = scmp.eq.s32.totalorder %s23, 0
      %p64 = por %p62, %p63
      %s65 = ssub.s32 %s24, %s36
      %p66 = scmp.eq.s32.totalorder %s65, 0
      %s68 = sadd.s32 %s67, 1
      %s69 = scalar_select %p66, %s67, %s68
      %p72 = pneg %p66
      %p73 = scmp.eq.s32.totalorder %s17, 1
      %p74 = por %p72, %p73
      %p75 = scmp.ne.s32.totalorder %s67, %s70
      %p76 = scmp.eq.s32.totalorder %s17, 0
      %p77 = por %p75, %p76
      %p78 = scmp.ne.s32.totalorder %s67, %s70
      %p79 = scmp.eq.s32.totalorder %s22, 1
      %p80 = por %p78, %p79
      %p81 = scmp.ne.s32.totalorder %s70, %s71
      %p82 = scmp.eq.s32.totalorder %s22, 0
      %p83 = por %p81, %p82
      %p84 = scmp.ne.s32.totalorder %s70, %s71
      %p85 = scmp.eq.s32.totalorder %s23, 1
      %p86 = por %p84, %p85
      %p88 = scmp.ne.s32.totalorder %s71, %s87
      %p89 = scmp.eq.s32.totalorder %s23, 0
      %p90 = por %p88, %p89
      %s91 = ssub.s32 %s24, %s36
      %s92 = ssub.s32 %s25, %s32
      %s93 = sor.u32 %s91, %s92
      %p94 = scmp.eq.s32.totalorder %s93, 0
      %s96 = sadd.s32 %s95, 1
      %s97 = scalar_select %p94, %s95, %s96
      %p100 = pneg %p94
      %p101 = scmp.eq.s32.totalorder %s17, 1
      %p102 = por %p100, %p101
      %p103 = scmp.ne.s32.totalorder %s95, %s98
      %p104 = scmp.eq.s32.totalorder %s17, 0
      %p105 = por %p103, %p104
      %p106 = scmp.ne.s32.totalorder %s95, %s98
      %p107 = scmp.eq.s32.totalorder %s22, 1
      %p108 = por %p106, %p107
      %p109 = scmp.ne.s32.totalorder %s98, %s99
      %p110 = scmp.eq.s32.totalorder %s22, 0
      %p111 = por %p109, %p110
      %p112 = scmp.ne.s32.totalorder %s98, %s99
      %p113 = scmp.eq.s32.totalorder %s23, 1
      %p114 = por %p112, %p113
      %p116 = scmp.ne.s32.totalorder %s99, %s115
      %p117 = scmp.eq.s32.totalorder %s23, 0
      %p118 = por %p116, %p117
      %p119 = scmp.le.s32.totalorder 1, %s17
      %p120 = scmp.lt.s32.totalorder %s17, 3
      %p121 = pnand %p119, %p120
      %p122 = pneg %p121
      // Predicated region
      $region9: #{tpu_custom_call.1} parent=5 // pred_check
        _
      $region10: #{tpu_custom_call.1} parent=5 // pred_check_branch
        %124 = sbr.rel (%p121) target = $region12
      $region11: #{tpu_custom_call.1} parent=5 // pred_region
        %s125 = ssub.s32 %s17, 1
      $region12: #{tpu_custom_call.1} parent=5 // pred_fallthru
        _
      %p126 = scmp.lt.s32.totalorder %s17, 2
      // Predicated region
      $region13: #{tpu_custom_call.1} parent=5 // pred_check
        %p127 = pneg %p126
      $region14: #{tpu_custom_call.1} parent=5 // pred_check_branch
        %129 = sbr.rel (%p127) target = $region16
      $region15: #{tpu_custom_call.1} parent=5 // pred_region
        // Predicated region
        $region17: #{tpu_custom_call.1} parent=15 // pred_check
          %p130 = pneg %p51
        $region18: #{tpu_custom_call.1} parent=15 // pred_check_branch
          %132 = sbr.rel (%p130) target = $region20
        $region19: #{tpu_custom_call.1} parent=15 // pred_region
          %s133 = sand.u32 %s41, 1
          %s134 = scalar_lea.sflag [#allocation3], %s133
          %s135 = sand.u32 %s41, 1
          %s136 = smul.addr %s135, 2
          %s137 = scalar_lea.vmem [#allocation2], %s136
          %s138 = smul.u32 2, %s25
          %140 = vsyncadd %s134, 0
          %s141 = smul.addr %s24, 2
          %s142 = sadd.s32 %s138, %s141
          %s143 = scalar_lea.hbm %s0, %s142
          %s145 = sshll.u32 %s143, 4
          %s146 = int_to_ptr.hbm [resolvable:$true] %s145
          %s147 = sshll.u32 %s137, 4
          %s148 = int_to_ptr.vmem [resolvable:$true] %s147
          %150 = dma.hbm_to_vmem [thread:$0]  %s146, 32, %s148, %s134
        $region20: #{tpu_custom_call.1} parent=15 // pred_fallthru
          _
        // Predicated region
        $region21: #{tpu_custom_call.1} parent=15 // pred_check
          %p151 = pneg %p77
        $region22: #{tpu_custom_call.1} parent=15 // pred_check_branch
          %153 = sbr.rel (%p151) target = $region24
        $region23: #{tpu_custom_call.1} parent=15 // pred_region
          %s154 = sand.u32 %s67, 1
          %s155 = scalar_lea.sflag [#allocation6], %s154
          %s156 = sand.u32 %s67, 1
          %s157 = smul.addr %s156, 4
          %s158 = scalar_lea.vmem [#allocation5], %s157
          %160 = vsyncadd %s155, 0
          %s161 = smul.addr %s24, 4
          %s162 = scalar_lea.hbm %s1, %s161
          %s164 = sshll.u32 %s162, 4
          %s165 = int_to_ptr.hbm [resolvable:$true] %s164
          %s166 = sshll.u32 %s158, 4
          %s167 = int_to_ptr.vmem [resolvable:$true] %s166
          %169 = dma.hbm_to_vmem [thread:$0]  %s165, 64, %s167, %s155
        $region24: #{tpu_custom_call.1} parent=15 // pred_fallthru
          _
      $region16: #{tpu_custom_call.1} parent=5 // pred_fallthru
        _
      %p170 = scmp.le.s32.totalorder 1, %s17
      %p171 = scmp.lt.s32.totalorder %s17, 3
      %p172 = pnand %p170, %p171
      %p173 = pneg %p172
      // Predicated region
      $region25: #{tpu_custom_call.1} parent=5 // pred_check
        _
      $region26: #{tpu_custom_call.1} parent=5 // pred_check_branch
        %175 = sbr.rel (%p172) target = $region28
      $region27: #{tpu_custom_call.1} parent=5 // pred_region
        %s176 = ssub.s32 %s17, 1
        %s177 = sand.u32 %s44, 1
        %s178 = scalar_lea.sflag [#allocation3], %s177
        %s179 = sand.u32 %s44, 1
        %s180 = smul.addr %s179, 2
        %s181 = scalar_lea.vmem [#allocation2], %s180
        // Predicated region
        $region29: #{tpu_custom_call.1} parent=27 // pred_check
          %p182 = pneg %p57
        $region30: #{tpu_custom_call.1} parent=27 // pred_check_branch
          %184 = sbr.rel (%p182) target = $region32
        $region31: #{tpu_custom_call.1} parent=27 // pred_region
          %186 = dma.done %s178, 32
        $region32: #{tpu_custom_call.1} parent=27 // pred_fallthru
          _
        %s187 = sand.u32 %s70, 1
        %s188 = scalar_lea.sflag [#allocation6], %s187
        %s189 = sand.u32 %s70, 1
        %s190 = smul.addr %s189, 4
        %s191 = scalar_lea.vmem [#allocation5], %s190
        // Predicated region
        $region33: #{tpu_custom_call.1} parent=27 // pred_check
          %p192 = pneg %p83
        $region34: #{tpu_custom_call.1} parent=27 // pred_check_branch
          %194 = sbr.rel (%p192) target = $region36
        $region35: #{tpu_custom_call.1} parent=27 // pred_region
          %196 = dma.done %s188, 64
        $region36: #{tpu_custom_call.1} parent=27 // pred_fallthru
          _
        %s197 = sand.u32 %s44, 1
        %s198 = scalar_lea.sflag [#allocation3], %s197
        %s199 = sand.u32 %s44, 1
        %s200 = smul.addr %s199, 2
        %s201 = scalar_lea.vmem [#allocation2], %s200
        %p202 = pneg %p57
        %p203 = pneg %p54
        %s204 = sand.u32 %s70, 1
        %s205 = scalar_lea.sflag [#allocation6], %s204
        %s206 = sand.u32 %s70, 1
        %s207 = smul.addr %s206, 4
        %s208 = scalar_lea.vmem [#allocation5], %s207
        %p209 = pneg %p83
        %p210 = pneg %p80
        %p211 = pneg %p111
        %p212 = pneg %p108
        %s213 = sand.u32 %s98, 1
        %s214 = scalar_lea.sflag [#allocation4], %s213
        %s215 = sand.u32 %s98, 1
        %s216 = smul.addr %s215, 8
        %s217 = scalar_lea.vmem [#allocation7], %s216
        %s218 = smul.u32 2, %s27
        %s219 = smul.u32 2, %s27
        %v220 = vld [vmem:[%s181] sm:$0x3]
        %v221 = vld [vmem:[%s191] sm:$0xf]
        %v222 = vlaneseq
        %v223 = vshrl.u32 %v222, 7
        %v224 = vadd.s32 %v223, 8
        %v225 = vadd.s32 %v223, 16
        %v226 = vadd.s32 %v223, 24
        %v227 = vadd.s32 %v223, 32
        %v228 = vadd.s32 %v223, 40
        %v229 = vadd.s32 %v223, 48
        %v230 = vadd.s32 %v223, 56
        %v231 = vadd.s32 %v223, 64
        %v232 = vadd.s32 %v223, 72
        %v233 = vadd.s32 %v223, 80
        %v234 = vadd.s32 %v223, 88
        %v235 = vadd.s32 %v223, 96
        %v236 = vadd.s32 %v223, 104
        %v237 = vadd.s32 %v223, 112
        %v238 = vadd.s32 %v223, 120
        %v239 = vperm.slane %v220, 0
        %v240 = vperm.slane %v220, 1
        %vm241 = vcmp.eq.s32.totalorder %v223, %v239
        %vm242 = vcmp.eq.s32.totalorder %v223, %v240
        %vm243 = vcmp.eq.s32.totalorder %v224, %v239
        %vm244 = vcmp.eq.s32.totalorder %v224, %v240
        %vm245 = vcmp.eq.s32.totalorder %v225, %v239
        %vm246 = vcmp.eq.s32.totalorder %v225, %v240
        %vm247 = vcmp.eq.s32.totalorder %v226, %v239
        %vm248 = vcmp.eq.s32.totalorder %v226, %v240
        %vm249 = vcmp.eq.s32.totalorder %v227, %v239
        %vm250 = vcmp.eq.s32.totalorder %v227, %v240
        %vm251 = vcmp.eq.s32.totalorder %v228, %v239
        %vm252 = vcmp.eq.s32.totalorder %v228, %v240
        %vm253 = vcmp.eq.s32.totalorder %v229, %v239
        %vm254 = vcmp.eq.s32.totalorder %v229, %v240
        %vm255 = vcmp.eq.s32.totalorder %v230, %v239
        %vm256 = vcmp.eq.s32.totalorder %v230, %v240
        %vm257 = vcmp.eq.s32.totalorder %v231, %v239
        %vm258 = vcmp.eq.s32.totalorder %v231, %v240
        %vm259 = vcmp.eq.s32.totalorder %v232, %v239
        %vm260 = vcmp.eq.s32.totalorder %v232, %v240
        %vm261 = vcmp.eq.s32.totalorder %v233, %v239
        %vm262 = vcmp.eq.s32.totalorder %v233, %v240
        %vm263 = vcmp.eq.s32.totalorder %v234, %v239
        %vm264 = vcmp.eq.s32.totalorder %v234, %v240
        %vm265 = vcmp.eq.s32.totalorder %v235, %v239
        %vm266 = vcmp.eq.s32.totalorder %v235, %v240
        %vm267 = vcmp.eq.s32.totalorder %v236, %v239
        %vm268 = vcmp.eq.s32.totalorder %v236, %v240
        %vm269 = vcmp.eq.s32.totalorder %v237, %v239
        %vm270 = vcmp.eq.s32.totalorder %v237, %v240
        %vm271 = vcmp.eq.s32.totalorder %v238, %v239
        %vm272 = vcmp.eq.s32.totalorder %v238, %v240
        %v273 = vsel %vm241, 1, 0
        %v274 = vsel %vm242, 1, 0
        %v275 = vsel %vm243, 1, 0
        %v276 = vsel %vm244, 1, 0
        %v277 = vsel %vm245, 1, 0
        %v278 = vsel %vm246, 1, 0
        %v279 = vsel %vm247, 1, 0
        %v280 = vsel %vm248, 1, 0
        %v281 = vsel %vm249, 1, 0
        %v282 = vsel %vm250, 1, 0
        %v283 = vsel %vm251, 1, 0
        %v284 = vsel %vm252, 1, 0
        %v285 = vsel %vm253, 1, 0
        %v286 = vsel %vm254, 1, 0
        %v287 = vsel %vm255, 1, 0
        %v288 = vsel %vm256, 1, 0
        %v289 = vsel %vm257, 1, 0
        %v290 = vsel %vm258, 1, 0
        %v291 = vsel %vm259, 1, 0
        %v292 = vsel %vm260, 1, 0
        %v293 = vsel %vm261, 1, 0
        %v294 = vsel %vm262, 1, 0
        %v295 = vsel %vm263, 1, 0
        %v296 = vsel %vm264, 1, 0
        %v297 = vsel %vm265, 1, 0
        %v298 = vsel %vm266, 1, 0
        %v299 = vsel %vm267, 1, 0
        %v300 = vsel %vm268, 1, 0
        %v301 = vsel %vm269, 1, 0
        %v302 = vsel %vm270, 1, 0
        %v303 = vsel %vm271, 1, 0
        %v304 = vsel %vm272, 1, 0
        %v305 = vcvt.s32.f32 %v273
        %v306 = vcvt.s32.f32 %v274
        %v307 = vcvt.s32.f32 %v275
        %v308 = vcvt.s32.f32 %v276
        %v309 = vcvt.s32.f32 %v277
        %v310 = vcvt.s32.f32 %v278
        %v311 = vcvt.s32.f32 %v279
        %v312 = vcvt.s32.f32 %v280
        %v313 = vcvt.s32.f32 %v281
        %v314 = vcvt.s32.f32 %v282
        %v315 = vcvt.s32.f32 %v283
        %v316 = vcvt.s32.f32 %v284
        %v317 = vcvt.s32.f32 %v285
        %v318 = vcvt.s32.f32 %v286
        %v319 = vcvt.s32.f32 %v287
        %v320 = vcvt.s32.f32 %v288
        %v321 = vcvt.s32.f32 %v289
        %v322 = vcvt.s32.f32 %v290
        %v323 = vcvt.s32.f32 %v291
        %v324 = vcvt.s32.f32 %v292
        %v325 = vcvt.s32.f32 %v293
        %v326 = vcvt.s32.f32 %v294
        %v327 = vcvt.s32.f32 %v295
        %v328 = vcvt.s32.f32 %v296
        %v329 = vcvt.s32.f32 %v297
        %v330 = vcvt.s32.f32 %v298
        %v331 = vcvt.s32.f32 %v299
        %v332 = vcvt.s32.f32 %v300
        %v333 = vcvt.s32.f32 %v301
        %v334 = vcvt.s32.f32 %v302
        %v335 = vcvt.s32.f32 %v303
        %v336 = vcvt.s32.f32 %v304
        %337 = vmatpush.msra.mxu0 %v335
        %338 = vmatpush.msra.mxu0 %v333
        %339 = vmatpush.msra.mxu0 %v331
        %340 = vmatpush.msra.mxu0 %v329
        %341 = vmatpush.msra.mxu0 %v327
        %342 = vmatpush.msra.mxu0 %v325
        %343 = vmatpush.msra.mxu0 %v323
        %344 = vmatpush.msra.mxu0 %v321
        %345 = vmatpush.msra.mxu0 %v319
        %346 = vmatpush.msra.mxu0 %v317
        %347 = vmatpush.msra.mxu0 %v315
        %348 = vmatpush.msra.mxu0 %v313
        %349 = vmatpush.msra.mxu0 %v311
        %350 = vmatpush.msra.mxu0 %v309
        %351 = vmatpush.msra.mxu0 %v307
        %352 = vmatpush.msra.mxu0 %v305
        %353 = vmatmul.f32.gmra.mxu0 %v221
        %v354 = vpop.f32.mrf.mxu0
        %v355 = vadd.f32 0.0, %v354
        %356 = vdwg.mxu0
        %357 = vmatpush.msra.mxu0 %v336
        %358 = vmatpush.msra.mxu0 %v334
        %359 = vmatpush.msra.mxu0 %v332
        %360 = vmatpush.msra.mxu0 %v330
        %361 = vmatpush.msra.mxu0 %v328
        %362 = vmatpush.msra.mxu0 %v326
        %363 = vmatpush.msra.mxu0 %v324
        %364 = vmatpush.msra.mxu0 %v322
        %365 = vmatpush.msra.mxu0 %v320
        %366 = vmatpush.msra.mxu0 %v318
        %367 = vmatpush.msra.mxu0 %v316
        %368 = vmatpush.msra.mxu0 %v314
        %369 = vmatpush.msra.mxu0 %v312
        %370 = vmatpush.msra.mxu0 %v310
        %371 = vmatpush.msra.mxu0 %v308
        %372 = vmatpush.msra.mxu0 %v306
        %373 = vmatmul.f32.gmra.mxu0 %v221
        %v374 = vpop.f32.mrf.mxu0
        %v375 = vadd.f32 0.0, %v374
        %376 = vdwg.mxu0
        %v379 = vrot.slane %v375, 4
        %vm380 = vcmask 1043456
        %v381 = vsel %vm380, %v355, %v379
        %383 = vst [vmem:[%s217] sm:$0xff] %v381
        %s384 = sand.u32 %s98, 1
        %s385 = scalar_lea.sflag [#allocation4], %s384
        %s386 = sand.u32 %s98, 1
        %s387 = smul.addr %s386, 8
        %s388 = scalar_lea.vmem [#allocation7], %s387
        // Predicated region
        $region37: #{tpu_custom_call.1} parent=27 // pred_check
          %p389 = pneg %p108
        $region38: #{tpu_custom_call.1} parent=27 // pred_check_branch
          %391 = sbr.rel (%p389) target = $region40
        $region39: #{tpu_custom_call.1} parent=27 // pred_region
          %s392 = smul.u32 2, %s27
          %394 = vsyncadd %s385, 0
          %s395 = smul.addr %s26, 2
          %s396 = sadd.s32 %s392, %s395
          %s397 = smul.addr %s396, 4
          %s398 = scalar_lea.hbm %s2, %s397
          %s400 = sshll.u32 %s388, 4
          %s401 = int_to_ptr.vmem [resolvable:$true] %s400
          %s402 = sshll.u32 %s398, 4
          %s403 = int_to_ptr.hbm [resolvable:$true] %s402
          %405 = dma.vmem_to_hbm [thread:$0]  %s401, 128, %s403, %s385
        $region40: #{tpu_custom_call.1} parent=27 // pred_fallthru
          _
      $region28: #{tpu_custom_call.1} parent=5 // pred_fallthru
        _
      %p406 = scmp.le.s32.totalorder 2, %s17
      // Predicated region
      $region41: #{tpu_custom_call.1} parent=5 // pred_check
        %p407 = pneg %p406
      $region42: #{tpu_custom_call.1} parent=5 // pred_check_branch
        %409 = sbr.rel (%p407) target = $region44
      $region43: #{tpu_custom_call.1} parent=5 // pred_region
        %s410 = ssub.s32 %s17, 2
        // Predicated region
        $region45: #{tpu_custom_call.1} parent=43 // pred_check
          %p411 = pneg %p114
        $region46: #{tpu_custom_call.1} parent=43 // pred_check_branch
          %413 = sbr.rel (%p411) target = $region48
        $region47: #{tpu_custom_call.1} parent=43 // pred_region
          %s414 = sand.u32 %s99, 1
          %s415 = scalar_lea.sflag [#allocation4], %s414
          %s416 = sand.u32 %s99, 1
          %s417 = smul.addr %s416, 8
          %s418 = scalar_lea.vmem [#allocation7], %s417
          %420 = dma.done %s415, 128
        $region48: #{tpu_custom_call.1} parent=43 // pred_fallthru
          _
      $region44: #{tpu_custom_call.1} parent=5 // pred_fallthru
        _
    $region6: #{tpu_custom_call.1} parent=1 // loop_footer
      %s21 = sadd.s32 1, %s17
    $region7: #{tpu_custom_call.1} parent=1 // loop_footer_branch
      %16 = sbr.rel target = $region3
    $region8: #{tpu_custom_call.1} parent=1 // loop_exit
      _
    %421 = vsyncpa [#allocation3], 1
    %s422 = scalar_lea.sflag [#allocation3], 1
    %423 = vsyncpa %s422, 1
    %424 = vsyncpa [#allocation6], 1
    %s425 = scalar_lea.sflag [#allocation6], 1
    %426 = vsyncpa %s425, 1
    %427 = vsyncpa [#allocation4], 1
    %s428 = scalar_lea.sflag [#allocation4], 1
    %429 = vsyncpa %s428, 1

</llo_original>
